<compile_context>
chip_gen: v7x
topology: tpu7x:2x2x1
jax: 0.10.0
libtpu: 0.0.40
codegen_flags: <defaults>
</compile_context>

<pallas_src>
import jax
import jax.numpy as jnp
from jax import lax
from jax.experimental import pallas as pl
from jax.experimental.pallas import tpu as pltpu

_LANES = 128
_SUBLANES = 8


def _make_cnn_vote_kernel(C, unroll_threshold=32):
    """Build the (C -> 1) 1x1-conv + ReLU kernel over dense (St, 128) slabs."""
    if C <= unroll_threshold:
        def kernel(x_ref, w_ref, b_ref, o_ref):
            # x_ref: (C, St, 128) VMEM   w_ref: (C,) SMEM   b_ref: (1,) SMEM
            # o_ref: (St, 128) VMEM
            acc = x_ref[0].astype(jnp.float32) * w_ref[0]
            for c in range(1, C):                       # short VPU FMA unroll
                acc = acc + x_ref[c].astype(jnp.float32) * w_ref[c]
            o_ref[...] = jnp.maximum(acc + b_ref[0], 0.0).astype(o_ref.dtype)
    else:
        # Large-C path: bounded-unroll loop keeps instruction-stream size flat and
        # avoids long accumulator live ranges from a full Python unroll.
        def kernel(x_ref, w_ref, b_ref, o_ref):
            def body(c, acc):
                return acc + x_ref[c].astype(jnp.float32) * w_ref[c]
            acc = lax.fori_loop(1, C, body,
                                x_ref[0].astype(jnp.float32) * w_ref[0],
                                unroll=4)
            o_ref[...] = jnp.maximum(acc + b_ref[0], 0.0).astype(o_ref.dtype)
    return kernel


def _choose_st(N, C, S, vmem_budget_bytes=6 << 20, min_total_steps=8):
    """Pick the sublane tile St along S from a C-aware VMEM budget.

    Per grid step the pipeline double-buffers the (C, St, 128) input slab and the
    (St, 128) output slab (f32): 2 * (C + 1) * St * 128 * 4 bytes.  Keep that under the
    budget, and keep roughly >= min_total_steps grid steps so v7x's two TensorCores both
    get work and the DMA pipeline has steps to overlap (per-step overhead ~0.35 us).
    """
    bytes_per_sublane_row = 2 * (C + 1) * _LANES * 4
    st_budget = max(_SUBLANES,
                    (vmem_budget_bytes // bytes_per_sublane_row)
                    // _SUBLANES * _SUBLANES)
    want_blocks = -(-min_total_steps // max(N, 1))              # cdiv
    st_parallel = max(_SUBLANES,
                      (-(-S // want_blocks)) // _SUBLANES * _SUBLANES)
    # TODO(synk): for extremely large C (2*C*8*128*4 > budget) even St=8 overshoots the
    # budget; that regime would need a reduction grid axis over channels.
    st = min(st_budget, st_parallel)
    if st >= S:
        return S            # single full-extent block along S (always layout-legal)
    return st               # multiple of 8 (< S); cdiv grid handles a partial last block


def cnn_vote_forward(x_nchw, weight, bias, *, vmem_budget_bytes=6 << 20):
    """Pallas implementation of CNNVote.forward for kernel_size=1, padding=0.

    x_nchw: (N, C, H, W) float32
    weight: (1, C, 1, 1) float32  (PyTorch Conv2d weight layout)
    bias:   (1,)         float32
    returns (N, 1, H, W) same dtype as x
    """
    N, C, H, W = x_nchw.shape
    out_dtype = x_nchw.dtype
    # TODO(synk): general kernel_size/padding would need an im2col stage before this
    # kernel; the module defaults (kernel_size=1, padding=0) are what is implemented.
    L = H * W
    L_pad = -(-L // _LANES) * _LANES
    x = x_nchw.reshape(N, C, L)                  # free reshape, stays in NCHW order
    if L_pad != L:
        # Tiny pad (< 128 elems per row) just to make the lane axis splittable; the bulk
        # case (H*W multiple of 128) copies nothing.
        x = jnp.pad(x, ((0, 0), (0, 0), (0, L_pad - L)))
    S = L_pad // _LANES
    x = x.reshape(N, C, S, _LANES)               # dense (sublane, lane) slabs; free

    St = _choose_st(N, C, S, vmem_budget_bytes)
    grid = (N, pl.cdiv(S, St))

    w = weight.reshape(C).astype(jnp.float32)    # (C,) -> SMEM scalars
    b = bias.reshape(1).astype(jnp.float32)      # (1,) -> SMEM scalar

    out = pl.pallas_call(
        _make_cnn_vote_kernel(C),
        out_shape=jax.ShapeDtypeStruct((N, S, _LANES), out_dtype),
        grid_spec=pltpu.PrefetchScalarGridSpec(
            num_scalar_prefetch=0,
            grid=grid,
            in_specs=[
                pl.BlockSpec((None, C, St, _LANES), lambda n, s: (n, 0, s, 0)),  # x
                pl.BlockSpec(memory_space=pltpu.SMEM),                           # weights
                pl.BlockSpec(memory_space=pltpu.SMEM),                           # bias
            ],
            out_specs=pl.BlockSpec((None, St, _LANES), lambda n, s: (n, s, 0)),
        ),
        compiler_params=pltpu.CompilerParams(
            dimension_semantics=("parallel", "parallel"),
            vmem_limit_bytes=32 * 1024 * 1024,   # safe on all of v5e/v6e/v7x
        ),
    )(x, w, b)

    out = out.reshape(N, S * _LANES)[:, :L]      # drop lane padding (no-op if aligned)
    return out.reshape(N, 1, H, W)               # already NCHW -- no transpose needed


if __name__ == "__main__":
    key = jax.random.PRNGKey(0)
    kx, kw, kb = jax.random.split(key, 3)

    # Small shapes consistent with the module: batch=2, channels=4, spatial=16x16.
    N, C, H, W = 2, 4, 16, 16
    x = jax.random.normal(kx, (N, C, H, W), dtype=jnp.float32)

    # Deterministic synthetic parameters (shapes from nn.Conv2d(C, 1, kernel_size=1)).
    weight = jax.random.normal(kw, (1, C, 1, 1), dtype=jnp.float32) * 0.1
    bias = jax.random.normal(kb, (1,), dtype=jnp.float32) * 0.1

    out = cnn_vote_forward(x, weight, bias)
    out = jax.block_until_ready(out)

    # Pure-JAX reference (same semantics as Conv2d 1x1 + ReLU).
    ref = jnp.maximum(
        jnp.einsum("nchw,c->nhw", x, weight.reshape(C)) + bias[0], 0.0
    )[:, None, :, :]

    assert out.shape == (N, 1, H, W), out.shape
    assert jnp.allclose(out, ref, atol=1e-5, rtol=1e-5), "mismatch vs reference"
    print("KERNEL_OK")
</pallas_src>

<mosaic_0001>
module attributes {stable_mosaic.version = 11 : i64} {
  func.func @kernel(%arg0: i32, %arg1: i32, %arg2: memref<1x4x2x128xf32, #tpu.memory_space<vmem>>, %arg3: memref<4xf32, #tpu.memory_space<smem>>, %arg4: memref<1xf32, #tpu.memory_space<smem>>, %arg5: memref<1x2x128xf32, #tpu.memory_space<vmem>>) attributes {dimension_semantics = [#tpu.dimension_semantics<parallel>, #tpu.dimension_semantics<parallel>], iteration_bounds = array<i64: 2, 1>, scalar_prefetch = 0 : i64, scratch_operands = 0 : i64, tpu.core_type = #tpu.core_type<tc>, window_params = [{transform_indices = @transform_0, window_bounds = array<i64: 1, 4, 2, 128>}, {transform_indices = @transform_1, window_bounds = array<i64: 4>}, {transform_indices = @transform_2, window_bounds = array<i64: 1>}, {transform_indices = @transform_3, window_bounds = array<i64: 1, 2, 128>}]} {
    %c0 = arith.constant 0 : index
    %c0_0 = arith.constant 0 : index
    %c0_1 = arith.constant 0 : index
    %c0_2 = arith.constant 0 : index
    %0 = vector.load %arg2[%c0, %c0_0, %c0_1, %c0_2] : memref<1x4x2x128xf32, #tpu.memory_space<vmem>>, vector<1x1x2x128xf32>
    %1 = vector.shape_cast %0 : vector<1x1x2x128xf32> to vector<2x128xf32>
    %c0_3 = arith.constant 0 : index
    %2 = memref.load %arg3[%c0_3] : memref<4xf32, #tpu.memory_space<smem>>
    %3 = vector.broadcast %2 : f32 to vector<2x128xf32>
    %4 = arith.mulf %1, %3 : vector<2x128xf32>
    %c0_4 = arith.constant 0 : index
    %c1 = arith.constant 1 : index
    %c0_5 = arith.constant 0 : index
    %c0_6 = arith.constant 0 : index
    %5 = vector.load %arg2[%c0_4, %c1, %c0_5, %c0_6] : memref<1x4x2x128xf32, #tpu.memory_space<vmem>>, vector<1x1x2x128xf32>
    %6 = vector.shape_cast %5 : vector<1x1x2x128xf32> to vector<2x128xf32>
    %c1_7 = arith.constant 1 : index
    %7 = memref.load %arg3[%c1_7] : memref<4xf32, #tpu.memory_space<smem>>
    %8 = vector.broadcast %7 : f32 to vector<2x128xf32>
    %9 = arith.mulf %6, %8 : vector<2x128xf32>
    %10 = arith.addf %4, %9 : vector<2x128xf32>
    %c0_8 = arith.constant 0 : index
    %c2 = arith.constant 2 : index
    %c0_9 = arith.constant 0 : index
    %c0_10 = arith.constant 0 : index
    %11 = vector.load %arg2[%c0_8, %c2, %c0_9, %c0_10] : memref<1x4x2x128xf32, #tpu.memory_space<vmem>>, vector<1x1x2x128xf32>
    %12 = vector.shape_cast %11 : vector<1x1x2x128xf32> to vector<2x128xf32>
    %c2_11 = arith.constant 2 : index
    %13 = memref.load %arg3[%c2_11] : memref<4xf32, #tpu.memory_space<smem>>
    %14 = vector.broadcast %13 : f32 to vector<2x128xf32>
    %15 = arith.mulf %12, %14 : vector<2x128xf32>
    %16 = arith.addf %10, %15 : vector<2x128xf32>
    %c0_12 = arith.constant 0 : index
    %c3 = arith.constant 3 : index
    %c0_13 = arith.constant 0 : index
    %c0_14 = arith.constant 0 : index
    %17 = vector.load %arg2[%c0_12, %c3, %c0_13, %c0_14] : memref<1x4x2x128xf32, #tpu.memory_space<vmem>>, vector<1x1x2x128xf32>
    %18 = vector.shape_cast %17 : vector<1x1x2x128xf32> to vector<2x128xf32>
    %c3_15 = arith.constant 3 : index
    %19 = memref.load %arg3[%c3_15] : memref<4xf32, #tpu.memory_space<smem>>
    %20 = vector.broadcast %19 : f32 to vector<2x128xf32>
    %21 = arith.mulf %18, %20 : vector<2x128xf32>
    %22 = arith.addf %16, %21 : vector<2x128xf32>
    %c0_16 = arith.constant 0 : index
    %23 = memref.load %arg4[%c0_16] : memref<1xf32, #tpu.memory_space<smem>>
    %24 = vector.broadcast %23 : f32 to vector<2x128xf32>
    %25 = arith.addf %22, %24 : vector<2x128xf32>
    %cst = arith.constant 0.000000e+00 : f32
    %26 = vector.broadcast %cst : f32 to vector<2x128xf32>
    %27 = arith.maximumf %25, %26 : vector<2x128xf32>
    %c0_17 = arith.constant 0 : index
    %c0_18 = arith.constant 0 : index
    %c0_19 = arith.constant 0 : index
    %28 = vector.load %arg5[%c0_17, %c0_18, %c0_19] : memref<1x2x128xf32, #tpu.memory_space<vmem>>, vector<1x2x128xf32>
    %29 = vector.shape_cast %28 : vector<1x2x128xf32> to vector<2x128xf32>
    %30 = vector.shape_cast %27 : vector<2x128xf32> to vector<1x2x128xf32>
    tpu.vector_store %arg5[%c0_17, %c0_18, %c0_19], %30 {strides = array<i32>} : memref<1x2x128xf32, #tpu.memory_space<vmem>>, vector<1x2x128xf32>,
    return
  }
  func.func @transform_0(%arg0: i32, %arg1: i32) -> (i32, i32, i32, i32) {
    %c0_i32 = arith.constant 0 : i32
    %c0_i32_0 = arith.constant 0 : i32
    %c0_i32_1 = arith.constant 0 : i32
    return %arg0, %c0_i32, %arg1, %c0_i32_0 : i32, i32, i32, i32
  }
  func.func @transform_1(%arg0: i32, %arg1: i32) -> i32 {
    %c0_i32 = arith.constant 0 : i32
    %c0_i32_0 = arith.constant 0 : i32
    return %c0_i32 : i32
  }
  func.func @transform_2(%arg0: i32, %arg1: i32) -> i32 {
    %c0_i32 = arith.constant 0 : i32
    %c0_i32_0 = arith.constant 0 : i32
    return %c0_i32 : i32
  }
  func.func @transform_3(%arg0: i32, %arg1: i32) -> (i32, i32, i32) {
    %c0_i32 = arith.constant 0 : i32
    %c0_i32_0 = arith.constant 0 : i32
    return %arg0, %arg1, %c0_i32 : i32, i32, i32
  }
}

</mosaic_0001>

<llo_original>
// kernel: tpu_custom_call.1
$region0: #{tpu_custom_call.1}
  #allocation0 [shape = 'u32[]', space=smem, size = 0x4, offset = 0x4, fixed_abs, tag = 'smem constant byte address 0x4 - core index']
  #allocation1 [shape = 'u32[144,128]{1,0:T(1,128)}', space=vmem, size = 0x12000, scoped, tag = 'internal scratch']
  #allocation2 [shape = 'f32[1]{0:T(128)S(6)}', space=smem, size = 0x200, scoped, tag = 'scoped memory for tpu_custom_call.1']
  %s0 = inlined_call_operand.hbm [shape: f32[2,4,2,128], index: 0, kind: input, shape index: {}]
  %s1 = inlined_call_operand.vmem [shape: f32[4], index: 1, kind: input, shape index: {}]
  %s2 = inlined_call_operand.<no memory space> [shape: f32[1], index: 2, kind: input, shape index: {}]
  %s3 = inlined_call_operand.hbm [shape: f32[2,2,128], index: 3, kind: output, shape index: {}]
  %s4 = sld [smem:[#allocation0]]
  $region53: #{tpu_custom_call.1} parent=0
    _
  %s6 = ssub.s32 1, %s4
  %s7 = scalar_select 0, %s6, %s4
  %8 = sst [smem:[#allocation2]] %s2
  $region1: #{tpu_custom_call.1} parent=0
    #allocation3 [shape = 'u8[8192]{0}', space=vmem, size = 0x2000, scoped, tag = 'input window, operand 0']
    #allocation4 [shape = 's32[2]{0}', space=sflag, size = 0x8, scoped, tag = 'scoped memory for tpu_custom_call.1']
    #allocation5 [shape = 's32[2]{0}', space=sflag, size = 0x8, scoped, tag = 'scoped memory for tpu_custom_call.1']
    #allocation6 [shape = 's32[2]{0}', space=sflag, size = 0x8, scoped, tag = 'scoped memory for tpu_custom_call.1']
    #allocation7 [shape = 'u8[512]{0}', space=smem, size = 0x200, scoped, tag = 'input window, operand 1, single buffered']
    #allocation8 [shape = 'u8[2048]{0}', space=vmem, size = 0x800, scoped, tag = 'output window, operand 0']
    %9 = vsyncpa [#allocation4], 0
    %s10 = scalar_lea.sflag [#allocation4], 1
    %11 = vsyncpa %s10, 0
    %12 = vsyncpa [#allocation6], 0
    %13 = vsyncpa [#allocation5], 0
    %s14 = scalar_lea.sflag [#allocation5], 1
    %15 = vsyncpa %s14, 0
    loop: start=0, step=1, limit=4
    $region2: #{tpu_custom_call.1} parent=1 // loop_pre_header
      _
    $region3: #{tpu_custom_call.1} parent=1 // loop_header
      %s17 = sphi 0, %s21
      %p18 = scmp.ge.s32.totalorder %s17, 4
      %s24 = sphi 0, %s36
      %s25 = sphi 0, %s32
      %s26 = sphi 0, %s24
      %s27 = sphi 0, %s25
      %s28 = sphi 0, %s26
      %s29 = sphi 0, %s27
      %s41 = sphi 0, %s43
      %s44 = sphi 0, %s41
      %s45 = sphi 0, %s44
      %s61 = sphi 0, %s45
      %s65 = sphi 0, %s65
      %s67 = sphi 0, %s65
      %s68 = sphi 0, %s67
      %s82 = sphi 0, %s68
      %s86 = sphi 0, %s86
      %s88 = sphi 0, %s86
      %s89 = sphi 0, %s88
      %s103 = sphi 0, %s89
      %s111 = sphi 0, %s113
      %s114 = sphi 0, %s111
      %s115 = sphi 0, %s114
      %s131 = sphi 0, %s115
    $region4: #{tpu_custom_call.1} parent=1 // loop_header_branch
      %20 = sbr.rel (%p18) target = $region8
    $region5: #{tpu_custom_call.1} parent=1 // loop_body
      %s22 = ssub.s32 %s17, 1
      %s23 = ssub.s32 %s17, 2
      %s30 = sadd.s32 1, %s25
      %p31 = scmp.ge.s32.totalorder %s30, 1
      %s32 = scalar_select %p31, 0, %s30
      %s33 = sadd.s32 1, %s24
      %s34 = scalar_select %p31, %s33, %s24
      %p35 = scmp.ge.s32.totalorder %s34, 2
      %s36 = scalar_select %p35, 0, %s34
      %s37 = ssub.s32 %s24, %s36
      %s38 = ssub.s32 %s25, %s32
      %s39 = sor.u32 %s37, %s38
      %p40 = scmp.eq.s32.totalorder %s39, 0
      %s42 = sadd.s32 %s41, 1
      %s43 = scalar_select %p40, %s41, %s42
      %p46 = pneg %p40
      %p47 = scmp.eq.s32.totalorder %s17, 1
      %p48 = por %p46, %p47
      %p49 = scmp.ne.s32.totalorder %s41, %s44
      %p50 = scmp.eq.s32.totalorder %s17, 0
      %p51 = por %p49, %p50
      %p52 = scmp.ne.s32.totalorder %s41, %s44
      %p53 = scmp.eq.s32.totalorder %s22, 1
      %p54 = por %p52, %p53
      %p55 = scmp.ne.s32.totalorder %s44, %s45
      %p56 = scmp.eq.s32.totalorder %s22, 0
      %p57 = por %p55, %p56
      %p58 = scmp.ne.s32.totalorder %s44, %s45
      %p59 = scmp.eq.s32.totalorder %s23, 1
      %p60 = por %p58, %p59
      %p62 = scmp.ne.s32.totalorder %s45, %s61
      %p63 = scmp.eq.s32.totalorder %s23, 0
      %p64 = por %p62, %p63
      %s66 = sadd.s32 %s65, 1
      %p69 = scmp.eq.s32.totalorder %s17, 1
      %p70 = scmp.ne.s32.totalorder %s65, %s67
      %p71 = scmp.eq.s32.totalorder %s17, 0
      %p72 = por %p70, %p71
      %p73 = scmp.ne.s32.totalorder %s65, %s67
      %p74 = scmp.eq.s32.totalorder %s22, 1
      %p75 = por %p73, %p74
      %p76 = scmp.ne.s32.totalorder %s67, %s68
      %p77 = scmp.eq.s32.totalorder %s22, 0
      %p78 = por %p76, %p77
      %p79 = scmp.ne.s32.totalorder %s67, %s68
      %p80 = scmp.eq.s32.totalorder %s23, 1
      %p81 = por %p79, %p80
      %p83 = scmp.ne.s32.totalorder %s68, %s82
      %p84 = scmp.eq.s32.totalorder %s23, 0
      %p85 = por %p83, %p84
      %s87 = sadd.s32 %s86, 1
      %p90 = scmp.eq.s32.totalorder %s17, 1
      %p91 = scmp.ne.s32.totalorder %s86, %s88
      %p92 = scmp.eq.s32.totalorder %s17, 0
      %p93 = por %p91, %p92
      %p94 = scmp.ne.s32.totalorder %s86, %s88
      %p95 = scmp.eq.s32.totalorder %s22, 1
      %p96 = por %p94, %p95
      %p97 = scmp.ne.s32.totalorder %s88, %s89
      %p98 = scmp.eq.s32.totalorder %s22, 0
      %p99 = por %p97, %p98
      %p100 = scmp.ne.s32.totalorder %s88, %s89
      %p101 = scmp.eq.s32.totalorder %s23, 1
      %p102 = por %p100, %p101
      %p104 = scmp.ne.s32.totalorder %s89, %s103
      %p105 = scmp.eq.s32.totalorder %s23, 0
      %p106 = por %p104, %p105
      %s107 = ssub.s32 %s24, %s36
      %s108 = ssub.s32 %s25, %s32
      %s109 = sor.u32 %s107, %s108
      %p110 = scmp.eq.s32.totalorder %s109, 0
      %s112 = sadd.s32 %s111, 1
      %s113 = scalar_select %p110, %s111, %s112
      %p116 = pneg %p110
      %p117 = scmp.eq.s32.totalorder %s17, 1
      %p118 = por %p116, %p117
      %p119 = scmp.ne.s32.totalorder %s111, %s114
      %p120 = scmp.eq.s32.totalorder %s17, 0
      %p121 = por %p119, %p120
      %p122 = scmp.ne.s32.totalorder %s111, %s114
      %p123 = scmp.eq.s32.totalorder %s22, 1
      %p124 = por %p122, %p123
      %p125 = scmp.ne.s32.totalorder %s114, %s115
      %p126 = scmp.eq.s32.totalorder %s22, 0
      %p127 = por %p125, %p126
      %p128 = scmp.ne.s32.totalorder %s114, %s115
      %p129 = scmp.eq.s32.totalorder %s23, 1
      %p130 = por %p128, %p129
      %p132 = scmp.ne.s32.totalorder %s115, %s131
      %p133 = scmp.eq.s32.totalorder %s23, 0
      %p134 = por %p132, %p133
      %p135 = scmp.le.s32.totalorder 1, %s17
      %p136 = scmp.lt.s32.totalorder %s17, 3
      %p137 = pnand %p135, %p136
      %p138 = pneg %p137
      // Predicated region
      $region9: #{tpu_custom_call.1} parent=5 // pred_check
        _
      $region10: #{tpu_custom_call.1} parent=5 // pred_check_branch
        %140 = sbr.rel (%p137) target = $region12
      $region11: #{tpu_custom_call.1} parent=5 // pred_region
        %s141 = ssub.s32 %s17, 1
        // Predicated region
        $region13: #{tpu_custom_call.1} parent=11 // pred_check
          %p142 = pneg %p78
        $region14: #{tpu_custom_call.1} parent=11 // pred_check_branch
          %144 = sbr.rel (%p142) target = $region16
        $region15: #{tpu_custom_call.1} parent=11 // pred_region
          %s146 = ssub.s32 16, 16
          %147 = vsyncadd [#allocation6], %s146
          %s149 = sshll.u32 %s1, 4
          %s150 = int_to_ptr.vmem [resolvable:$true] %s149
          %152 = dma.vmem_to_smem %s150, 16, [#allocation7], [#allocation6]
        $region16: #{tpu_custom_call.1} parent=11 // pred_fallthru
          _
        // Predicated region
        $region17: #{tpu_custom_call.1} parent=11 // pred_check
          %p153 = pneg %p99
        $region18: #{tpu_custom_call.1} parent=11 // pred_check_branch
          %155 = sbr.rel (%p153) target = $region20
        $region19: #{tpu_custom_call.1} parent=11 // pred_region
          _
        $region20: #{tpu_custom_call.1} parent=11 // pred_fallthru
          _
      $region12: #{tpu_custom_call.1} parent=5 // pred_fallthru
        _
      %p156 = scmp.lt.s32.totalorder %s17, 2
      // Predicated region
      $region21: #{tpu_custom_call.1} parent=5 // pred_check
        %p157 = pneg %p156
      $region22: #{tpu_custom_call.1} parent=5 // pred_check_branch
        %159 = sbr.rel (%p157) target = $region24
      $region23: #{tpu_custom_call.1} parent=5 // pred_region
        // Predicated region
        $region25: #{tpu_custom_call.1} parent=23 // pred_check
          %p160 = pneg %p51
        $region26: #{tpu_custom_call.1} parent=23 // pred_check_branch
          %162 = sbr.rel (%p160) target = $region28
        $region27: #{tpu_custom_call.1} parent=23 // pred_region
          %s163 = sand.u32 %s41, 1
          %s164 = scalar_lea.sflag [#allocation4], %s163
          %s165 = sand.u32 %s41, 1
          %s166 = smul.addr %s165, 8
          %s167 = scalar_lea.vmem [#allocation3], %s166
          %s169 = ssub.s32 128, 128
          %170 = vsyncadd %s164, %s169
          %s171 = smul.addr %s24, 4
          %s172 = sadd.s32 %s25, %s171
          %s173 = smul.addr %s172, 32
          %s174 = scalar_lea.hbm %s0, %s173
          %s175 = sshll.u32 %s167, 4
          %s176 = int_to_ptr.vmem [resolvable:$true] %s175
          %181 = dma.hbm_to_vmem [thread:$0]  %s174, 128, %s176, %s164, 32, 32, 2
        $region28: #{tpu_custom_call.1} parent=23 // pred_fallthru
          _
      $region24: #{tpu_custom_call.1} parent=5 // pred_fallthru
        _
      %p182 = scmp.le.s32.totalorder 1, %s17
      %p183 = scmp.lt.s32.totalorder %s17, 3
      %p184 = pnand %p182, %p183
      %p185 = pneg %p184
      // Predicated region
      $region29: #{tpu_custom_call.1} parent=5 // pred_check
        _
      $region30: #{tpu_custom_call.1} parent=5 // pred_check_branch
        %187 = sbr.rel (%p184) target = $region32
      $region31: #{tpu_custom_call.1} parent=5 // pred_region
        %s188 = ssub.s32 %s17, 1
        %s189 = sand.u32 %s44, 1
        %s190 = scalar_lea.sflag [#allocation4], %s189
        %s191 = sand.u32 %s44, 1
        %s192 = smul.addr %s191, 8
        %s193 = scalar_lea.vmem [#allocation3], %s192
        // Predicated region
        $region33: #{tpu_custom_call.1} parent=31 // pred_check
          %p194 = pneg %p57
        $region34: #{tpu_custom_call.1} parent=31 // pred_check_branch
          %196 = sbr.rel (%p194) target = $region36
        $region35: #{tpu_custom_call.1} parent=31 // pred_region
          %197 = dma.done %s190, 128
        $region36: #{tpu_custom_call.1} parent=31 // pred_fallthru
          _
        // Predicated region
        $region37: #{tpu_custom_call.1} parent=31 // pred_check
          %p198 = pneg %p78
        $region38: #{tpu_custom_call.1} parent=31 // pred_check_branch
          %200 = sbr.rel (%p198) target = $region40
        $region39: #{tpu_custom_call.1} parent=31 // pred_region
          %201 = dma.done [#allocation6], 16
        $region40: #{tpu_custom_call.1} parent=31 // pred_fallthru
          _
        %202 = sfence
        %s203 = sand.u32 %s44, 1
        %s204 = scalar_lea.sflag [#allocation4], %s203
        %s205 = sand.u32 %s44, 1
        %s206 = smul.addr %s205, 8
        %s207 = scalar_lea.vmem [#allocation3], %s206
        %p208 = pneg %p57
        %p209 = pneg %p54
        %p210 = pneg %p78
        %p211 = pneg %p75
        %p212 = pneg %p99
        %p213 = pneg %p96
        %p214 = pneg %p127
        %p215 = pneg %p124
        %s216 = sand.u32 %s114, 1
        %s217 = scalar_lea.sflag [#allocation5], %s216
        %s218 = sand.u32 %s114, 1
        %s219 = smul.addr %s218, 2
        %s220 = scalar_lea.vmem [#allocation8], %s219
        %v221 = vld [vmem:[%s193] sm:$0x3]
        %s222 = sld [smem:[#allocation7]]
        %v223 = vstv %s222
        %v224 = vmul.f32 %v221, %v223
        %s225 = scalar_lea.vmem %s193, 2 [#allocation3]
        %v226 = vld [vmem:[%s225] sm:$0x3]
        %s227 = sld [smem:[#allocation7 + $0x1]]
        %v228 = vstv %s227
        %v229 = vmul.f32 %v226, %v228
        %v230 = vadd.f32 %v224, %v229
        %s231 = scalar_lea.vmem %s193, 4 [#allocation3]
        %v232 = vld [vmem:[%s231] sm:$0x3]
        %s233 = sld [smem:[#allocation7 + $0x2]]
        %v234 = vstv %s233
        %v235 = vmul.f32 %v232, %v234
        %v236 = vadd.f32 %v230, %v235
        %s237 = scalar_lea.vmem %s193, 6 [#allocation3]
        %v238 = vld [vmem:[%s237] sm:$0x3]
        %s239 = sld [smem:[#allocation7 + $0x3]]
        %v240 = vstv %s239
        %v241 = vmul.f32 %v238, %v240
        %v242 = vadd.f32 %v236, %v241
        %s243 = sld [smem:[#allocation2]]
        %v244 = vstv %s243
        %v245 = vadd.f32 %v242, %v244
        %v246 = vmax.f32 %v245, 0.0
        %247 = vst [vmem:[%s220] sm:$0x3] %v246
        %s248 = sand.u32 %s114, 1
        %s249 = scalar_lea.sflag [#allocation5], %s248
        %s250 = sand.u32 %s114, 1
        %s251 = smul.addr %s250, 2
        %s252 = scalar_lea.vmem [#allocation8], %s251
        // Predicated region
        $region41: #{tpu_custom_call.1} parent=31 // pred_check
          %p253 = pneg %p124
        $region42: #{tpu_custom_call.1} parent=31 // pred_check_branch
          %255 = sbr.rel (%p253) target = $region44
        $region43: #{tpu_custom_call.1} parent=31 // pred_region
          %s257 = ssub.s32 32, 32
          %258 = vsyncadd %s249, %s257
          %s259 = sadd.s32 %s27, %s26
          %s260 = smul.addr %s259, 32
          %s261 = scalar_lea.hbm %s3, %s260
          %s263 = sshll.u32 %s252, 4
          %s264 = int_to_ptr.vmem [resolvable:$true] %s263
          %266 = dma.vmem_to_hbm [thread:$0]  %s264, 32, %s261, %s249
        $region44: #{tpu_custom_call.1} parent=31 // pred_fallthru
          _
      $region32: #{tpu_custom_call.1} parent=5 // pred_fallthru
        _
      %p267 = scmp.le.s32.totalorder 2, %s17
      // Predicated region
      $region45: #{tpu_custom_call.1} parent=5 // pred_check
        %p268 = pneg %p267
      $region46: #{tpu_custom_call.1} parent=5 // pred_check_branch
        %270 = sbr.rel (%p268) target = $region48
      $region47: #{tpu_custom_call.1} parent=5 // pred_region
        %s271 = ssub.s32 %s17, 2
        // Predicated region
        $region49: #{tpu_custom_call.1} parent=47 // pred_check
          %p272 = pneg %p130
        $region50: #{tpu_custom_call.1} parent=47 // pred_check_branch
          %274 = sbr.rel (%p272) target = $region52
        $region51: #{tpu_custom_call.1} parent=47 // pred_region
          %s275 = sand.u32 %s115, 1
          %s276 = scalar_lea.sflag [#allocation5], %s275
          %s277 = sand.u32 %s115, 1
          %s278 = smul.addr %s277, 2
          %s279 = scalar_lea.vmem [#allocation8], %s278
          %280 = dma.done %s276, 32
        $region52: #{tpu_custom_call.1} parent=47 // pred_fallthru
          _
      $region48: #{tpu_custom_call.1} parent=5 // pred_fallthru
        _
    $region6: #{tpu_custom_call.1} parent=1 // loop_footer
      %s21 = sadd.s32 1, %s17
    $region7: #{tpu_custom_call.1} parent=1 // loop_footer_branch
      %16 = sbr.rel target = $region3
    $region8: #{tpu_custom_call.1} parent=1 // loop_exit
      _
    %281 = vsyncpa [#allocation4], 1
    %s282 = scalar_lea.sflag [#allocation4], 1
    %283 = vsyncpa %s282, 1
    %284 = vsyncpa [#allocation5], 1
    %s285 = scalar_lea.sflag [#allocation5], 1
    %286 = vsyncpa %s285, 1
    %287 = vsyncpa [#allocation6], 1
    %s288 = scalar_lea.sflag [#allocation6], 1
    %289 = vsyncpa %s288, 1

</llo_original>
